<compile_context>
chip_gen: v7x
topology: tpu7x:2x2x1
jax: 0.10.0
libtpu: 0.0.40
codegen_flags: <defaults>
</compile_context>

<pallas_src>
import math
from functools import partial

import numpy as np
import jax
import jax.numpy as jnp
from jax.experimental import pallas as pl
from jax.experimental.pallas import tpu as pltpu


_POOL_LEVELS = (1, 2, 4)
_N_PAD = 128          # lane-dense output width (only sum(L*L)=21 lanes are used)
_TM_CAP = 4096        # absolute row-tile cap


def _round_up(x, m):
    return ((x + m - 1) // m) * m


def _membership_and_scale(H, W, levels):
    """0/1 bin-membership weight (H*W, 128) + exact f32 1/count per-column scale (1, 128).

    pooled[r, col(L,i,j)] = (1/count_ij) * sum_{(h,w) in bin ij} x[r, h*W + w],
    reproducing F.adaptive_avg_pool2d bin boundaries exactly for arbitrary H, W.
    """
    cols, counts = [], []
    for L in levels:
        for i in range(L):
            hs = (i * H) // L
            he = -((-(i + 1) * H) // L)          # ceil((i+1)*H/L)
            for j in range(L):
                ws = (j * W) // L
                we = -((-(j + 1) * W) // L)
                m = np.zeros((H, W), np.float32)
                m[hs:he, ws:we] = 1.0
                cols.append(m.reshape(H * W))
                counts.append((he - hs) * (we - ws))
    w = np.stack(cols, axis=1)                    # (H*W, n_out), exact 0/1 values
    n_out = w.shape[1]
    assert n_out <= _N_PAD, "too many pyramid bins for a single 128-lane output block"
    w_pad = np.zeros((H * W, _N_PAD), np.float32)
    w_pad[:, :n_out] = w
    scale = np.ones((1, _N_PAD), np.float32)
    scale[0, :n_out] = 1.0 / np.asarray(counts, np.float32)
    return w_pad, scale, n_out


def _spp_kernel(x_ref, w_ref, s_ref, o_ref):
    # x_ref: (tm, HW) activation rows; w_ref: (HW, 128) resident 0/1 membership weight;
    # s_ref: (1, 128) f32 per-column 1/count; o_ref: (tm, 128) lane-dense output.
    # One MXU push per grid step, f32 accumulation, exact f32 averaging, single final cast.
    acc = jnp.dot(x_ref[...], w_ref[...], preferred_element_type=jnp.float32)
    o_ref[...] = (acc * s_ref[...]).astype(o_ref.dtype)


@partial(jax.jit, static_argnames=("pool_levels",))
def spp_pool2d(x, pool_levels=_POOL_LEVELS):
    """JAX/Pallas equivalent of SPPool2d(in_channels=C, pool_type='avg').forward(x)."""
    # TODO(synk): pool_type='max' (adaptive max pool) not implemented; this covers the default 'avg'.
    B, C, H, W = x.shape
    HW = H * W
    M = B * C
    bpe = jnp.dtype(x.dtype).itemsize
    sub = max(8, 32 // bpe)                      # sublane multiple: 8 f32 / 16 bf16 / 32 int8

    # --- VMEM-derived row tile (biggest that fits; aim for >=4 grid steps for v7x megacore) ---
    try:
        phys_vmem = int(getattr(pltpu.get_tpu_info(), "vmem_capacity_bytes",
                                64 * 1024 * 1024))
    except Exception:
        phys_vmem = 64 * 1024 * 1024             # conservative default (v7x)
    w_bytes = HW * _N_PAD * bpe
    per_row = 3 * HW * bpe + 2 * _N_PAD * bpe    # up to 3 act buffers + 2 out buffers per row
    tile_budget = min(phys_vmem // 3, 24 * 1024 * 1024)
    tm_cap = max(sub, ((tile_budget - 2 * w_bytes) // per_row) // sub * sub)
    tm_cap = min(tm_cap, _TM_CAP)
    tm = max(sub, min(tm_cap, _round_up(pl.cdiv(M, 4), sub)))
    n_steps = pl.cdiv(M, tm)

    # Request roughly what we actually use (+headroom), never a big slice of v7x's 64 MiB.
    vmem_need = 2 * w_bytes + tm * per_row + (1 << 20)
    vmem_limit = int(min(phys_vmem // 2, max(16 * 1024 * 1024, vmem_need + (8 << 20))))

    # (B*C, H*W) GEMM view — pure metadata reshape, no HBM copy, no padding of M or H*W.
    x2 = x.reshape(M, HW)
    w_np, s_np, n_out = _membership_and_scale(H, W, tuple(pool_levels))
    w = jnp.asarray(w_np, dtype=x.dtype)         # 0/1 -> exact in any dtype (bf16 MXU on v5e)
    s = jnp.asarray(s_np, dtype=jnp.float32)     # exact f32 1/count applied to f32 accumulator

    # Deeper input prefetch only when the grid is long enough for it to matter.
    act_spec = (pl.BlockSpec((tm, HW), lambda i: (i, 0), pipeline_mode=pl.Buffered(3))
                if n_steps >= 3 else pl.BlockSpec((tm, HW), lambda i: (i, 0)))

    out = pl.pallas_call(
        _spp_kernel,
        out_shape=jax.ShapeDtypeStruct((M, _N_PAD), x.dtype),
        grid_spec=pltpu.PrefetchScalarGridSpec(
            num_scalar_prefetch=0,
            grid=(n_steps,),
            in_specs=[
                act_spec,                                       # activation row tile
                pl.BlockSpec((HW, _N_PAD), lambda i: (0, 0)),   # resident membership weight
                pl.BlockSpec((1, _N_PAD), lambda i: (0, 0)),    # resident 1/count scale
            ],
            out_specs=pl.BlockSpec((tm, _N_PAD), lambda i: (i, 0)),
        ),
        compiler_params=pltpu.CompilerParams(
            dimension_semantics=("parallel",),
            vmem_limit_bytes=vmem_limit,
        ),
        cost_estimate=pl.CostEstimate(
            flops=2 * M * HW * _N_PAD,
            transcendentals=0,
            bytes_accessed=M * HW * bpe + M * _N_PAD * bpe + HW * _N_PAD * bpe + _N_PAD * 4,
        ),
    )(x2, w, s)

    # Epilogue (fused under jit): drop padded lanes, reproduce flatten(1,-1) + cat per level.
    pooled = out[:, :n_out].reshape(B, C, n_out)
    parts, off = [], 0
    for L in pool_levels:
        n = L * L
        parts.append(pooled[:, :, off:off + n].reshape(B, C * n))
        off += n
    return jnp.concatenate(parts, axis=1)


def _reference_spp(x_np, pool_levels=_POOL_LEVELS):
    """Pure-numpy reference reproducing F.adaptive_avg_pool2d + flatten + cat."""
    B, C, H, W = x_np.shape
    parts = []
    for L in pool_levels:
        out = np.zeros((B, C, L, L), dtype=np.float64)
        for i in range(L):
            hs = (i * H) // L
            he = -((-(i + 1) * H) // L)
            for j in range(L):
                ws = (j * W) // L
                we = -((-(j + 1) * W) // L)
                out[:, :, i, j] = x_np[:, :, hs:he, ws:we].mean(axis=(2, 3))
        parts.append(out.reshape(B, -1))
    return np.concatenate(parts, axis=1)


if __name__ == "__main__":
    key = jax.random.PRNGKey(0)

    # Primary small shape implied by the module.
    B, C, H, W = 2, 4, 16, 16
    x = jax.random.normal(key, (B, C, H, W), dtype=jnp.float32)
    y = jax.block_until_ready(spp_pool2d(x))
    out_channels = sum(C * int(math.pow(L, 2)) for L in _POOL_LEVELS)  # 84
    assert y.shape == (B, out_channels), y.shape
    np.testing.assert_allclose(np.asarray(y), _reference_spp(np.asarray(x)),
                               rtol=1e-5, atol=1e-5)

    # Odd shape: ragged last row tile (B*C=15 not a multiple of tm) and non-aligned H*W=63.
    x2 = jax.random.normal(jax.random.PRNGKey(1), (3, 5, 7, 9), dtype=jnp.float32)
    y2 = jax.block_until_ready(spp_pool2d(x2))
    assert y2.shape == (3, 5 * 21), y2.shape
    np.testing.assert_allclose(np.asarray(y2), _reference_spp(np.asarray(x2)),
                               rtol=1e-5, atol=1e-5)

    print("KERNEL_OK")
</pallas_src>

<mosaic_0001>
module attributes {stable_mosaic.version = 11 : i64} {
  func.func @_spp_kernel(%arg0: i32, %arg1: memref<8x256xf32, #tpu.memory_space<vmem>>, %arg2: memref<256x128xf32, #tpu.memory_space<vmem>>, %arg3: memref<1x128xf32, #tpu.memory_space<vmem>>, %arg4: memref<8x128xf32, #tpu.memory_space<vmem>>) attributes {dimension_semantics = [#tpu.dimension_semantics<parallel>], iteration_bounds = array<i64: 1>, scalar_prefetch = 0 : i64, scratch_operands = 0 : i64, tpu.core_type = #tpu.core_type<tc>, window_params = [{transform_indices = @transform_0, window_bounds = array<i64: 8, 256>}, {pipeline_mode = #tpu.pipeline_mode<synchronous>, transform_indices = @transform_1, window_bounds = array<i64: 256, 128>}, {pipeline_mode = #tpu.pipeline_mode<synchronous>, transform_indices = @transform_2, window_bounds = array<i64: 1, 128>}, {transform_indices = @transform_3, window_bounds = array<i64: 8, 128>}]} {
    %c0 = arith.constant 0 : index
    %c0_0 = arith.constant 0 : index
    %0 = vector.load %arg1[%c0, %c0_0] : memref<8x256xf32, #tpu.memory_space<vmem>>, vector<8x256xf32>
    %c0_1 = arith.constant 0 : index
    %c0_2 = arith.constant 0 : index
    %1 = vector.load %arg2[%c0_1, %c0_2] : memref<256x128xf32, #tpu.memory_space<vmem>>, vector<256x128xf32>
    %cst = arith.constant dense<0.000000e+00> : vector<8x128xf32>
    %2 = tpu.matmul %0, %1, %cst {dimension_numbers = #tpu.dot_dimension_numbers<[1], [0], [0], [1], [0, 0, 1, 1], [], []>} : vector<8x256xf32>, vector<256x128xf32>, vector<8x128xf32> -> vector<8x128xf32>
    %c0_3 = arith.constant 0 : index
    %c0_4 = arith.constant 0 : index
    %3 = vector.load %arg3[%c0_3, %c0_4] : memref<1x128xf32, #tpu.memory_space<vmem>>, vector<1x128xf32>
    %4 = vector.broadcast %3 : vector<1x128xf32> to vector<8x128xf32>
    %5 = arith.mulf %2, %4 : vector<8x128xf32>
    %c0_5 = arith.constant 0 : index
    %c0_6 = arith.constant 0 : index
    %6 = vector.load %arg4[%c0_5, %c0_6] : memref<8x128xf32, #tpu.memory_space<vmem>>, vector<8x128xf32>
    tpu.vector_store %arg4[%c0_5, %c0_6], %5 {strides = array<i32>} : memref<8x128xf32, #tpu.memory_space<vmem>>, vector<8x128xf32>,
    return
  }
  func.func @transform_0(%arg0: i32) -> (i32, i32) {
    %c0_i32 = arith.constant 0 : i32
    %c0_i32_0 = arith.constant 0 : i32
    return %arg0, %c0_i32 : i32, i32
  }
  func.func @transform_1(%arg0: i32) -> (i32, i32) {
    %c0_i32 = arith.constant 0 : i32
    %c0_i32_0 = arith.constant 0 : i32
    %c0_i32_1 = arith.constant 0 : i32
    return %c0_i32, %c0_i32_0 : i32, i32
  }
  func.func @transform_2(%arg0: i32) -> (i32, i32) {
    %c0_i32 = arith.constant 0 : i32
    %c0_i32_0 = arith.constant 0 : i32
    %c0_i32_1 = arith.constant 0 : i32
    return %c0_i32, %c0_i32_0 : i32, i32
  }
  func.func @transform_3(%arg0: i32) -> (i32, i32) {
    %c0_i32 = arith.constant 0 : i32
    %c0_i32_0 = arith.constant 0 : i32
    return %arg0, %c0_i32 : i32, i32
  }
}

</mosaic_0001>

<llo_original>
// kernel: spp_pool2d.1
$region0: #{spp_pool2d.1}
  #allocation0 [shape = 'u32[]', space=smem, size = 0x4, offset = 0x4, fixed_abs, tag = 'smem constant byte address 0x4 - core index']
  #allocation1 [shape = 'u32[144,128]{1,0:T(1,128)}', space=vmem, size = 0x12000, scoped, tag = 'internal scratch']
  %s0 = inlined_call_operand.vmem [shape: f32[8,256], index: 0, kind: input, shape index: {}]
  %s1 = inlined_call_operand.hbm [shape: f32[256,128], index: 1, kind: input, shape index: {}]
  %s2 = inlined_call_operand.vmem [shape: f32[1,128], index: 2, kind: input, shape index: {}]
  %s3 = inlined_call_operand.vmem [shape: f32[8,128], index: 3, kind: output, shape index: {}]
  %s4 = sld [smem:[#allocation0]]
  $region26: #{spp_pool2d.1} parent=0
    _
  %s6 = ssub.s32 1, %s4
  %s7 = scalar_select 0, %s6, %s4
  $region1: #{spp_pool2d.1} parent=0
    #allocation2 [shape = 'u8[131072]{0}', space=vmem, size = 0x20000, scoped, tag = 'input window, operand 1, single buffered']
    #allocation3 [shape = 's32[1]{0}', space=sflag, size = 0x4, scoped, tag = 'scoped memory for spp_pool2d.1']
    %8 = vsyncpa [#allocation3], 0
    // Predicated region
    $region2: #{spp_pool2d.1} parent=1 // pred_check
      _
    $region3: #{spp_pool2d.1} parent=1 // pred_check_branch
      %10 = sbr.rel (0) target = $region5
    $region4: #{spp_pool2d.1} parent=1 // pred_region
      _
    $region5: #{spp_pool2d.1} parent=1 // pred_fallthru
      _
    // Predicated region
    $region6: #{spp_pool2d.1} parent=1 // pred_check
      _
    $region7: #{spp_pool2d.1} parent=1 // pred_check_branch
      %12 = sbr.rel (0) target = $region9
    $region8: #{spp_pool2d.1} parent=1 // pred_region
      %s14 = ssub.s32 4096, 4096
      %15 = vsyncadd [#allocation3], %s14
      %s16 = sshll.u32 [#allocation2], 4
      %s17 = int_to_ptr.vmem [resolvable:$true] %s16
      %22 = dma.hbm_to_vmem [thread:$0]  %s1, 4096, %s17, [#allocation3], 128, 128, 8
    $region9: #{spp_pool2d.1} parent=1 // pred_fallthru
      _
    // Predicated region
    $region10: #{spp_pool2d.1} parent=1 // pred_check
      _
    $region11: #{spp_pool2d.1} parent=1 // pred_check_branch
      %24 = sbr.rel (0) target = $region13
    $region12: #{spp_pool2d.1} parent=1 // pred_region
      _
    $region13: #{spp_pool2d.1} parent=1 // pred_fallthru
      _
    // Predicated region
    $region14: #{spp_pool2d.1} parent=1 // pred_check
      _
    $region15: #{spp_pool2d.1} parent=1 // pred_check_branch
      %26 = sbr.rel (0) target = $region17
    $region16: #{spp_pool2d.1} parent=1 // pred_region
      %27 = dma.done [#allocation3], 4096
    $region17: #{spp_pool2d.1} parent=1 // pred_fallthru
      _
    %v28 = vld [vmem:[%s0] sm:$0xff]
    %v29 = vld [vmem:[%s0 + $0x8] sm:$0xff]
    %v30 = vld [vmem:[#allocation2] sm:$0xff]
    %v31 = vld [vmem:[#allocation2 + $0x8] sm:$0xff]
    %v32 = vld [vmem:[#allocation2 + $0x10] sm:$0xff]
    %v33 = vld [vmem:[#allocation2 + $0x18] sm:$0xff]
    %v34 = vld [vmem:[#allocation2 + $0x20] sm:$0xff]
    %v35 = vld [vmem:[#allocation2 + $0x28] sm:$0xff]
    %v36 = vld [vmem:[#allocation2 + $0x30] sm:$0xff]
    %v37 = vld [vmem:[#allocation2 + $0x38] sm:$0xff]
    %v38 = vld [vmem:[#allocation2 + $0x40] sm:$0xff]
    %v39 = vld [vmem:[#allocation2 + $0x48] sm:$0xff]
    %v40 = vld [vmem:[#allocation2 + $0x50] sm:$0xff]
    %v41 = vld [vmem:[#allocation2 + $0x58] sm:$0xff]
    %v42 = vld [vmem:[#allocation2 + $0x60] sm:$0xff]
    %v43 = vld [vmem:[#allocation2 + $0x68] sm:$0xff]
    %v44 = vld [vmem:[#allocation2 + $0x70] sm:$0xff]
    %v45 = vld [vmem:[#allocation2 + $0x78] sm:$0xff]
    %v46 = vld [vmem:[#allocation2 + $0x80] sm:$0xff]
    %v47 = vld [vmem:[#allocation2 + $0x88] sm:$0xff]
    %v48 = vld [vmem:[#allocation2 + $0x90] sm:$0xff]
    %v49 = vld [vmem:[#allocation2 + $0x98] sm:$0xff]
    %v50 = vld [vmem:[#allocation2 + $0xa0] sm:$0xff]
    %v51 = vld [vmem:[#allocation2 + $0xa8] sm:$0xff]
    %v52 = vld [vmem:[#allocation2 + $0xb0] sm:$0xff]
    %v53 = vld [vmem:[#allocation2 + $0xb8] sm:$0xff]
    %v54 = vld [vmem:[#allocation2 + $0xc0] sm:$0xff]
    %v55 = vld [vmem:[#allocation2 + $0xc8] sm:$0xff]
    %v56 = vld [vmem:[#allocation2 + $0xd0] sm:$0xff]
    %v57 = vld [vmem:[#allocation2 + $0xd8] sm:$0xff]
    %v58 = vld [vmem:[#allocation2 + $0xe0] sm:$0xff]
    %v59 = vld [vmem:[#allocation2 + $0xe8] sm:$0xff]
    %v60 = vld [vmem:[#allocation2 + $0xf0] sm:$0xff]
    %v61 = vld [vmem:[#allocation2 + $0xf8] sm:$0xff]
    %62 = vmatprep.subr.mxu0 0.0
    %63 = vmatpush1.msra.mxu0 %v30
    %64 = vmatprep.subr.mxu0 0.0
    %65 = vmatpush1.msra.mxu0 %v31
    %66 = vmatprep.subr.mxu0 0.0
    %67 = vmatpush1.msra.mxu0 %v32
    %68 = vmatprep.subr.mxu0 0.0
    %69 = vmatpush1.msra.mxu0 %v33
    %70 = vmatprep.subr.mxu0 0.0
    %71 = vmatpush1.msra.mxu0 %v34
    %72 = vmatprep.subr.mxu0 0.0
    %73 = vmatpush1.msra.mxu0 %v35
    %74 = vmatprep.subr.mxu0 0.0
    %75 = vmatpush1.msra.mxu0 %v36
    %76 = vmatprep.subr.mxu0 0.0
    %77 = vmatpush1.msra.mxu0 %v37
    %78 = vmatprep.subr.mxu0 0.0
    %79 = vmatpush1.msra.mxu0 %v38
    %80 = vmatprep.subr.mxu0 0.0
    %81 = vmatpush1.msra.mxu0 %v39
    %82 = vmatprep.subr.mxu0 0.0
    %83 = vmatpush1.msra.mxu0 %v40
    %84 = vmatprep.subr.mxu0 0.0
    %85 = vmatpush1.msra.mxu0 %v41
    %86 = vmatprep.subr.mxu0 0.0
    %87 = vmatpush1.msra.mxu0 %v42
    %88 = vmatprep.subr.mxu0 0.0
    %89 = vmatpush1.msra.mxu0 %v43
    %90 = vmatprep.subr.mxu0 0.0
    %91 = vmatpush1.msra.mxu0 %v44
    %92 = vmatprep.subr.mxu0 0.0
    %93 = vmatpush1.msra.mxu0 %v45
    %94 = vmatprep.subr.mxu0 0.0
    %95 = vmatpush1.msra.mxu0 %v46
    %96 = vmatprep.subr.mxu0 0.0
    %97 = vmatpush1.msra.mxu0 %v47
    %98 = vmatprep.subr.mxu0 0.0
    %99 = vmatpush1.msra.mxu0 %v48
    %100 = vmatprep.subr.mxu0 0.0
    %101 = vmatpush1.msra.mxu0 %v49
    %102 = vmatprep.subr.mxu0 0.0
    %103 = vmatpush1.msra.mxu0 %v50
    %104 = vmatprep.subr.mxu0 0.0
    %105 = vmatpush1.msra.mxu0 %v51
    %106 = vmatprep.subr.mxu0 0.0
    %107 = vmatpush1.msra.mxu0 %v52
    %108 = vmatprep.subr.mxu0 0.0
    %109 = vmatpush1.msra.mxu0 %v53
    %110 = vmatprep.subr.mxu0 0.0
    %111 = vmatpush1.msra.mxu0 %v54
    %112 = vmatprep.subr.mxu0 0.0
    %113 = vmatpush1.msra.mxu0 %v55
    %114 = vmatprep.subr.mxu0 0.0
    %115 = vmatpush1.msra.mxu0 %v56
    %116 = vmatprep.subr.mxu0 0.0
    %117 = vmatpush1.msra.mxu0 %v57
    %118 = vmatprep.subr.mxu0 0.0
    %119 = vmatpush1.msra.mxu0 %v58
    %120 = vmatprep.subr.mxu0 0.0
    %121 = vmatpush1.msra.mxu0 %v59
    %122 = vmatprep.subr.mxu0 0.0
    %123 = vmatpush1.msra.mxu0 %v60
    %124 = vmatprep.subr.mxu0 0.0
    %125 = vmatpush1.msra.mxu0 %v61
    %126 = vmatprep.mubr.f32.mxu0 %v29
    %127 = vmatmul.mubr.f32.gmra.mrb[0].mxu0 %v28
    %v128 = vpop.f32.mrb[0].mxu0
    %v129 = vadd.f32 0.0, %v128
    %v130 = vpop.f32.mrb[0].mxu0
    %131 = vdwg.mxu0
    %v132 = vld [vmem:[%s2] sm:$0x1]
    %v134 = vlaneseq
    %v135 = vshrl.u32 %v134, 7
    %v136 = vsub.s32 0, %v135
    %v137 = vrot.slane %v132, %v136
    %v139 = vmul.f32 %v129, %v137
    %140 = vst [vmem:[%s3] sm:$0xff] %v139
    // Predicated region
    $region18: #{spp_pool2d.1} parent=1 // pred_check
      _
    $region19: #{spp_pool2d.1} parent=1 // pred_check_branch
      %142 = sbr.rel (0) target = $region21
    $region20: #{spp_pool2d.1} parent=1 // pred_region
      _
    $region21: #{spp_pool2d.1} parent=1 // pred_fallthru
      _
    // Predicated region
    $region22: #{spp_pool2d.1} parent=1 // pred_check
      _
    $region23: #{spp_pool2d.1} parent=1 // pred_check_branch
      %144 = sbr.rel (0) target = $region25
    $region24: #{spp_pool2d.1} parent=1 // pred_region
      _
    $region25: #{spp_pool2d.1} parent=1 // pred_fallthru
      _
    %145 = vsyncpa [#allocation3], 1

</llo_original>
